<compile_context>
chip_gen: v6e
topology: v6e:2x2x1
jax: 0.10.0
libtpu: 0.0.40
codegen_flags: <defaults>
</compile_context>

<pallas_src>
import jax
import jax.numpy as jnp
from jax.experimental import pallas as pl
from jax.experimental.pallas import tpu as pltpu


def _full_spec(shape):
    # grid=() -> nullary index_map, block == whole (small) array, kept in VMEM.
    return pl.BlockSpec(shape, lambda: tuple(0 for _ in shape))


# ---------------------------------------------------------------------------
# Single cell step (matches the torch module's forward exactly).
# ---------------------------------------------------------------------------
def rnn_cell_kernel(data_ref, hid_ref, w1_ref, b1_ref, w2_ref, b2_ref,
                    hidden_out_ref, output_out_ref, cat_ref):
    D = data_ref.shape[1]
    H = hid_ref.shape[1]
    # Build cat(data, last_hidden) once in a VMEM scratch -> single i2h matmul.
    cat_ref[:, :D] = data_ref[...]
    cat_ref[:, D:D + H] = hid_ref[...]
    hidden = (jnp.dot(cat_ref[...], w1_ref[...],
                      preferred_element_type=jnp.float32) + b1_ref[...])
    hidden_out_ref[...] = hidden.astype(hidden_out_ref.dtype)
    output = (jnp.dot(hidden, w2_ref[...],
                      preferred_element_type=jnp.float32) + b2_ref[...])
    output_out_ref[...] = output.astype(output_out_ref.dtype)


def rnn_forward(data, last_hidden, w1, b1, w2, b2):
    """One RNN step.  w1: (D+H, H), b1: (H,), w2: (H, O), b2: (O,)."""
    B, D = data.shape
    H = last_hidden.shape[1]
    O = w2.shape[1]
    return pl.pallas_call(
        rnn_cell_kernel,
        out_shape=(
            jax.ShapeDtypeStruct((B, H), jnp.float32),
            jax.ShapeDtypeStruct((B, O), jnp.float32),
        ),
        grid=(),
        in_specs=[
            _full_spec((B, D)),
            _full_spec((B, H)),
            _full_spec((D + H, H)),
            _full_spec((1, H)),
            _full_spec((H, O)),
            _full_spec((1, O)),
        ],
        out_specs=(
            _full_spec((B, H)),
            _full_spec((B, O)),
        ),
        scratch_shapes=[pltpu.VMEM((B, D + H), jnp.float32)],
    )(data, last_hidden, w1, b1.reshape(1, H), w2, b2.reshape(1, O))


# ---------------------------------------------------------------------------
# Fused sequence: T cell steps in ONE pallas_call.
# ---------------------------------------------------------------------------
def rnn_seq_kernel(data_ref, h0_ref, w1_ref, b1_ref, w2_ref, b2_ref,
                   hseq_ref, oseq_ref, cat_ref):
    B, H = h0_ref.shape
    D = cat_ref.shape[1] - H
    T = hseq_ref.shape[1] // H
    O = oseq_ref.shape[1] // T

    # Hoist weight loads and bias broadcasts out of the time loop
    # (JAX does not CSE broadcast_in_dim).
    w1 = w1_ref[...]
    w2 = w2_ref[...]
    b1 = jnp.broadcast_to(b1_ref[...], (B, H))
    b2 = jnp.broadcast_to(b2_ref[...], (B, O))

    h = h0_ref[...]
    # T is small and static -> fully unrolled loop; every slice offset is static,
    # so no dynamic lane indexing is generated.
    for t in range(T):
        cat_ref[:, :D] = data_ref[:, t * D:(t + 1) * D]
        cat_ref[:, D:D + H] = h
        h = jnp.dot(cat_ref[...], w1, preferred_element_type=jnp.float32) + b1
        out_t = jnp.dot(h, w2, preferred_element_type=jnp.float32) + b2
        # Per-step results land in the VMEM-resident lane-dense output slabs;
        # the HBM writeback happens once at kernel end as wide stores.
        hseq_ref[:, t * H:(t + 1) * H] = h
        oseq_ref[:, t * O:(t + 1) * O] = out_t


def rnn_forward_seq(data_seq, h0, w1, b1, w2, b2):
    """Run T fused RNN steps.

    data_seq: (T, B, D); returns (hidden_seq (T,B,H), output_seq (T,B,O)),
    identical to calling the torch module once per timestep.
    """
    T, B, D = data_seq.shape
    H = h0.shape[1]
    O = w2.shape[1]

    # Present all timesteps as one lane-contiguous slab (B, T*D).
    data_slab = jnp.transpose(data_seq, (1, 0, 2)).reshape(B, T * D)

    hseq, oseq = pl.pallas_call(
        rnn_seq_kernel,
        out_shape=(
            jax.ShapeDtypeStruct((B, T * H), jnp.float32),
            jax.ShapeDtypeStruct((B, T * O), jnp.float32),
        ),
        grid=(),
        in_specs=[
            _full_spec((B, T * D)),
            _full_spec((B, H)),
            _full_spec((D + H, H)),
            _full_spec((1, H)),
            _full_spec((H, O)),
            _full_spec((1, O)),
        ],
        out_specs=(
            _full_spec((B, T * H)),
            _full_spec((B, T * O)),
        ),
        scratch_shapes=[pltpu.VMEM((B, D + H), jnp.float32)],
    )(data_slab, h0, w1, b1.reshape(1, H), w2, b2.reshape(1, O))

    hidden_seq = hseq.reshape(B, T, H).transpose(1, 0, 2)
    output_seq = oseq.reshape(B, T, O).transpose(1, 0, 2)
    return hidden_seq, output_seq


if __name__ == "__main__":
    # Small, TPU-friendly shapes consistent with the module's forward.
    B = 8    # batch
    D = 16   # data_size
    H = 32   # hidden_size
    O = 16   # output_size
    T = 8    # timesteps for the fused-sequence kernel (T*H=256, T*O=128 lanes)

    key = jax.random.PRNGKey(0)
    k_data, k_seq, k_w1, k_b1, k_w2, k_b2 = jax.random.split(key, 6)

    data = jax.random.normal(k_data, (B, D), dtype=jnp.float32)
    data_seq = jax.random.normal(k_seq, (T, B, D), dtype=jnp.float32)
    last_hidden = jnp.zeros((B, H), dtype=jnp.float32)  # like torch.zeros hidden

    # Deterministic parameter init (emulating nn.Linear uniform ranges).
    in1 = D + H
    w1 = jax.random.uniform(k_w1, (in1, H), minval=-1.0 / jnp.sqrt(in1),
                            maxval=1.0 / jnp.sqrt(in1), dtype=jnp.float32)
    b1 = jax.random.uniform(k_b1, (H,), minval=-1.0 / jnp.sqrt(in1),
                            maxval=1.0 / jnp.sqrt(in1), dtype=jnp.float32)
    w2 = jax.random.uniform(k_w2, (H, O), minval=-1.0 / jnp.sqrt(H),
                            maxval=1.0 / jnp.sqrt(H), dtype=jnp.float32)
    b2 = jax.random.uniform(k_b2, (O,), minval=-1.0 / jnp.sqrt(H),
                            maxval=1.0 / jnp.sqrt(H), dtype=jnp.float32)

    # --- Single step (exact module forward semantics) -----------------------
    hidden, output = rnn_forward(data, last_hidden, w1, b1, w2, b2)
    jax.block_until_ready((hidden, output))

    cat = jnp.concatenate([data, last_hidden], axis=1)
    hidden_ref = cat @ w1 + b1
    output_ref = hidden_ref @ w2 + b2
    assert jnp.allclose(hidden, hidden_ref, atol=1e-5, rtol=1e-5)
    assert jnp.allclose(output, output_ref, atol=1e-5, rtol=1e-5)

    # --- Fused T-step sequence ----------------------------------------------
    hidden_seq, output_seq = rnn_forward_seq(data_seq, last_hidden, w1, b1, w2, b2)
    jax.block_until_ready((hidden_seq, output_seq))

    def ref_step(h, x):
        c = jnp.concatenate([x, h], axis=1)
        h_new = c @ w1 + b1
        o = h_new @ w2 + b2
        return h_new, (h_new, o)

    _, (hidden_seq_ref, output_seq_ref) = jax.lax.scan(ref_step, last_hidden, data_seq)
    assert jnp.allclose(hidden_seq, hidden_seq_ref, atol=1e-4, rtol=1e-4)
    assert jnp.allclose(output_seq, output_seq_ref, atol=1e-4, rtol=1e-4)

    print("KERNEL_OK")
</pallas_src>

<mosaic_0001>
module attributes {stable_mosaic.version = 11 : i64} {
  func.func @rnn_cell_kernel(%arg0: memref<8x16xf32, #tpu.memory_space<vmem>>, %arg1: memref<8x32xf32, #tpu.memory_space<vmem>>, %arg2: memref<48x32xf32, #tpu.memory_space<vmem>>, %arg3: memref<1x32xf32, #tpu.memory_space<vmem>>, %arg4: memref<32x16xf32, #tpu.memory_space<vmem>>, %arg5: memref<1x16xf32, #tpu.memory_space<vmem>>, %arg6: memref<8x32xf32, #tpu.memory_space<vmem>>, %arg7: memref<8x16xf32, #tpu.memory_space<vmem>>, %arg8: memref<8x48xf32, #tpu.memory_space<vmem>>) attributes {dimension_semantics = [], scalar_prefetch = 0 : i64, scratch_operands = 1 : i64, tpu.core_type = #tpu.core_type<tc>} {
    %c0 = arith.constant 0 : index
    %c0_0 = arith.constant 0 : index
    %0 = vector.load %arg0[%c0, %c0_0] : memref<8x16xf32, #tpu.memory_space<vmem>>, vector<8x16xf32>
    %c0_1 = arith.constant 0 : index
    %c0_2 = arith.constant 0 : index
    %1 = vector.load %arg8[%c0_1, %c0_2] : memref<8x48xf32, #tpu.memory_space<vmem>>, vector<8x16xf32>
    tpu.vector_store %arg8[%c0_1, %c0_2], %0 {strides = array<i32>} : memref<8x48xf32, #tpu.memory_space<vmem>>, vector<8x16xf32>,
    %c0_3 = arith.constant 0 : index
    %c0_4 = arith.constant 0 : index
    %2 = vector.load %arg1[%c0_3, %c0_4] : memref<8x32xf32, #tpu.memory_space<vmem>>, vector<8x32xf32>
    %c0_5 = arith.constant 0 : index
    %c16 = arith.constant 16 : index
    %3 = vector.load %arg8[%c0_5, %c16] : memref<8x48xf32, #tpu.memory_space<vmem>>, vector<8x32xf32>
    tpu.vector_store %arg8[%c0_5, %c16], %2 {strides = array<i32>} : memref<8x48xf32, #tpu.memory_space<vmem>>, vector<8x32xf32>,
    %c0_6 = arith.constant 0 : index
    %c0_7 = arith.constant 0 : index
    %4 = vector.load %arg8[%c0_6, %c0_7] : memref<8x48xf32, #tpu.memory_space<vmem>>, vector<8x48xf32>
    %c0_8 = arith.constant 0 : index
    %c0_9 = arith.constant 0 : index
    %5 = vector.load %arg2[%c0_8, %c0_9] : memref<48x32xf32, #tpu.memory_space<vmem>>, vector<48x32xf32>
    %cst = arith.constant dense<0.000000e+00> : vector<8x32xf32>
    %6 = tpu.matmul %4, %5, %cst {dimension_numbers = #tpu.dot_dimension_numbers<[1], [0], [0], [1], [0, 0, 1, 1], [], []>} : vector<8x48xf32>, vector<48x32xf32>, vector<8x32xf32> -> vector<8x32xf32>
    %c0_10 = arith.constant 0 : index
    %c0_11 = arith.constant 0 : index
    %7 = vector.load %arg3[%c0_10, %c0_11] : memref<1x32xf32, #tpu.memory_space<vmem>>, vector<1x32xf32>
    %8 = vector.broadcast %7 : vector<1x32xf32> to vector<8x32xf32>
    %9 = arith.addf %6, %8 : vector<8x32xf32>
    %c0_12 = arith.constant 0 : index
    %c0_13 = arith.constant 0 : index
    %10 = vector.load %arg6[%c0_12, %c0_13] : memref<8x32xf32, #tpu.memory_space<vmem>>, vector<8x32xf32>
    tpu.vector_store %arg6[%c0_12, %c0_13], %9 {strides = array<i32>} : memref<8x32xf32, #tpu.memory_space<vmem>>, vector<8x32xf32>,
    %c0_14 = arith.constant 0 : index
    %c0_15 = arith.constant 0 : index
    %11 = vector.load %arg4[%c0_14, %c0_15] : memref<32x16xf32, #tpu.memory_space<vmem>>, vector<32x16xf32>
    %cst_16 = arith.constant dense<0.000000e+00> : vector<8x16xf32>
    %12 = tpu.matmul %9, %11, %cst_16 {dimension_numbers = #tpu.dot_dimension_numbers<[1], [0], [0], [1], [0, 0, 1, 1], [], []>} : vector<8x32xf32>, vector<32x16xf32>, vector<8x16xf32> -> vector<8x16xf32>
    %c0_17 = arith.constant 0 : index
    %c0_18 = arith.constant 0 : index
    %13 = vector.load %arg5[%c0_17, %c0_18] : memref<1x16xf32, #tpu.memory_space<vmem>>, vector<1x16xf32>
    %14 = vector.broadcast %13 : vector<1x16xf32> to vector<8x16xf32>
    %15 = arith.addf %12, %14 : vector<8x16xf32>
    %c0_19 = arith.constant 0 : index
    %c0_20 = arith.constant 0 : index
    %16 = vector.load %arg7[%c0_19, %c0_20] : memref<8x16xf32, #tpu.memory_space<vmem>>, vector<8x16xf32>
    tpu.vector_store %arg7[%c0_19, %c0_20], %15 {strides = array<i32>} : memref<8x16xf32, #tpu.memory_space<vmem>>, vector<8x16xf32>,
    return
  }
}

</mosaic_0001>

<llo_original>
// kernel: tpu_custom_call.1
$region0: #{tpu_custom_call.1}
  #allocation0 [shape = 'u32[]', space=smem, size = 0x4, offset = 0x4, fixed_abs, tag = 'smem constant byte address 0x4 - core index']
  #allocation1 [shape = 'u32[144,128]{1,0:T(1,128)}', space=vmem, size = 0x12000, scoped, tag = 'internal scratch']
  #allocation2 [shape = 'f32[8,48]{1,0:T(8,128)}', space=vmem, size = 0x1000, scoped, tag = 'scratch operand']
  %s0 = inlined_call_operand.vmem [shape: f32[8,16], index: 0, kind: input, shape index: {}]
  %s1 = inlined_call_operand.vmem [shape: f32[8,32], index: 1, kind: input, shape index: {}]
  %s2 = inlined_call_operand.vmem [shape: f32[48,32], index: 2, kind: input, shape index: {}]
  %s3 = inlined_call_operand.vmem [shape: f32[1,32], index: 3, kind: input, shape index: {}]
  %s4 = inlined_call_operand.vmem [shape: f32[32,16], index: 4, kind: input, shape index: {}]
  %s5 = inlined_call_operand.vmem [shape: f32[1,16], index: 5, kind: input, shape index: {}]
  %s6 = inlined_call_operand.hbm [shape: f32[8,32], index: 6, kind: output, shape index: {0}]
  %s7 = inlined_call_operand.hbm [shape: f32[8,16], index: 7, kind: output, shape index: {1}]
  %8 = xla_tuple %s6, %s7
  %s9 = sld [smem:[#allocation0]]
  $region42: #{tpu_custom_call.1} parent=0
    _
  %s11 = ssub.s32 1, %s9
  %s12 = scalar_select 0, %s11, %s9
  $region1: #{tpu_custom_call.1} parent=0
    #allocation3 [shape = 'u8[4096]{0}', space=vmem, size = 0x1000, scoped, tag = 'output window, operand 0, single buffered']
    #allocation4 [shape = 's32[1]{0}', space=sflag, size = 0x4, scoped, tag = 'scoped memory for tpu_custom_call.1']
    #allocation5 [shape = 'u8[4096]{0}', space=vmem, size = 0x1000, scoped, tag = 'output window, operand 1, single buffered']
    #allocation6 [shape = 's32[1]{0}', space=sflag, size = 0x4, scoped, tag = 'scoped memory for tpu_custom_call.1']
    %13 = vsyncpa [#allocation4], 0
    %14 = vsyncpa [#allocation6], 0
    // Predicated region
    $region2: #{tpu_custom_call.1} parent=1 // pred_check
      _
    $region3: #{tpu_custom_call.1} parent=1 // pred_check_branch
      %16 = sbr.rel (0) target = $region5
    $region4: #{tpu_custom_call.1} parent=1 // pred_region
      _
    $region5: #{tpu_custom_call.1} parent=1 // pred_fallthru
      _
    // Predicated region
    $region6: #{tpu_custom_call.1} parent=1 // pred_check
      _
    $region7: #{tpu_custom_call.1} parent=1 // pred_check_branch
      %18 = sbr.rel (0) target = $region9
    $region8: #{tpu_custom_call.1} parent=1 // pred_region
      _
    $region9: #{tpu_custom_call.1} parent=1 // pred_fallthru
      _
    // Predicated region
    $region10: #{tpu_custom_call.1} parent=1 // pred_check
      _
    $region11: #{tpu_custom_call.1} parent=1 // pred_check_branch
      %20 = sbr.rel (0) target = $region13
    $region12: #{tpu_custom_call.1} parent=1 // pred_region
      _
    $region13: #{tpu_custom_call.1} parent=1 // pred_fallthru
      _
    // Predicated region
    $region14: #{tpu_custom_call.1} parent=1 // pred_check
      _
    $region15: #{tpu_custom_call.1} parent=1 // pred_check_branch
      %22 = sbr.rel (0) target = $region17
    $region16: #{tpu_custom_call.1} parent=1 // pred_region
      _
    $region17: #{tpu_custom_call.1} parent=1 // pred_fallthru
      _
    // Predicated region
    $region18: #{tpu_custom_call.1} parent=1 // pred_check
      _
    $region19: #{tpu_custom_call.1} parent=1 // pred_check_branch
      %24 = sbr.rel (0) target = $region21
    $region20: #{tpu_custom_call.1} parent=1 // pred_region
      _
    $region21: #{tpu_custom_call.1} parent=1 // pred_fallthru
      _
    // Predicated region
    $region22: #{tpu_custom_call.1} parent=1 // pred_check
      _
    $region23: #{tpu_custom_call.1} parent=1 // pred_check_branch
      %26 = sbr.rel (0) target = $region25
    $region24: #{tpu_custom_call.1} parent=1 // pred_region
      _
    $region25: #{tpu_custom_call.1} parent=1 // pred_fallthru
      _
    %v27 = vld [vmem:[%s0] sm:$0xff]
    %vm28 = vcmask 130048
    %29 = vst.msk [vmem:[#allocation2] sm:$0xff] %vm28, %v27
    %v30 = vld [vmem:[%s1] sm:$0xff]
    %32 = vrot.lane.b32.xlu0 %v30, 16
    %v33 = vpop.permute.xlu0 %32
    %vm35 = vcmask 392320
    %36 = vst.msk [vmem:[#allocation2] sm:$0xff] %vm35, %v33
    %v37 = vld [vmem:[#allocation2] sm:$0xff]
    %v38 = vld [vmem:[%s2] sm:$0xff]
    %v39 = vld [vmem:[%s2 + $0x8] sm:$0xff]
    %v40 = vld [vmem:[%s2 + $0x10] sm:$0xff]
    %v41 = vld [vmem:[%s2 + $0x18] sm:$0xff]
    %v42 = vld [vmem:[%s2 + $0x20] sm:$0xff]
    %v43 = vld [vmem:[%s2 + $0x28] sm:$0xff]
    %v44 = vld [vmem:[%s3] sm:$0x1]
    %v46 = vlaneseq
    %v47 = vshrl.u32 %v46, 7
    %v48 = vsub.s32 0, %v47
    %v49 = vrot.slane %v44, %v48
    %vm51 = vcmask 392192
    %v53 = vsel %vm51, %v37, 0
    %55 = vmatprep.subr.mxu0 0.0
    %56 = vmatpush1.msra.mxu0 0.0
    %57 = vmatprep.subr.mxu0 0.0
    %58 = vmatpush1.msra.mxu0 0.0
    %59 = vmatprep.subr.mxu0 0.0
    %60 = vmatpush1.msra.mxu0 0.0
    %61 = vmatprep.subr.mxu0 0.0
    %62 = vmatpush1.msra.mxu0 0.0
    %63 = vmatprep.subr.mxu0 0.0
    %64 = vmatpush1.msra.mxu0 0.0
    %65 = vmatprep.subr.mxu0 0.0
    %66 = vmatpush1.msra.mxu0 0.0
    %67 = vmatprep.subr.mxu0 0.0
    %68 = vmatpush1.msra.mxu0 0.0
    %69 = vmatprep.subr.mxu0 0.0
    %70 = vmatpush1.msra.mxu0 0.0
    %71 = vmatprep.subr.mxu0 0.0
    %72 = vmatpush1.msra.mxu0 0.0
    %73 = vmatprep.subr.mxu0 0.0
    %74 = vmatpush1.msra.mxu0 0.0
    %75 = vmatprep.subr.mxu0 0.0
    %76 = vmatpush1.msra.mxu0 %v43
    %77 = vmatprep.subr.mxu0 0.0
    %78 = vmatpush1.msra.mxu0 %v42
    %79 = vmatprep.subr.mxu0 0.0
    %80 = vmatpush1.msra.mxu0 %v41
    %81 = vmatprep.subr.mxu0 0.0
    %82 = vmatpush1.msra.mxu0 %v40
    %83 = vmatprep.subr.mxu0 0.0
    %84 = vmatpush1.msra.mxu0 %v39
    %85 = vmatprep.subr.mxu0 0.0
    %86 = vmatpush1.msra.mxu0 %v38
    %87 = vmatprep.subr.mxu0 0.0
    %88 = vmatpush2.msra.mxu0 0.0
    %89 = vmatprep.subr.mxu0 0.0
    %90 = vmatpush2.msra.mxu0 0.0
    %91 = vmatprep.subr.mxu0 0.0
    %92 = vmatpush2.msra.mxu0 0.0
    %93 = vmatprep.subr.mxu0 0.0
    %94 = vmatpush2.msra.mxu0 0.0
    %95 = vmatprep.subr.mxu0 0.0
    %96 = vmatpush2.msra.mxu0 0.0
    %97 = vmatprep.subr.mxu0 0.0
    %98 = vmatpush2.msra.mxu0 0.0
    %99 = vmatprep.subr.mxu0 0.0
    %100 = vmatpush2.msra.mxu0 0.0
    %101 = vmatprep.subr.mxu0 0.0
    %102 = vmatpush2.msra.mxu0 0.0
    %103 = vmatprep.subr.mxu0 0.0
    %104 = vmatpush2.msra.mxu0 0.0
    %105 = vmatprep.subr.mxu0 0.0
    %106 = vmatpush2.msra.mxu0 0.0
    %107 = vmatprep.subr.mxu0 0.0
    %108 = vmatpush2.msra.mxu0 0.0
    %109 = vmatprep.subr.mxu0 0.0
    %110 = vmatpush2.msra.mxu0 0.0
    %111 = vmatprep.subr.mxu0 0.0
    %112 = vmatpush2.msra.mxu0 0.0
    %113 = vmatprep.subr.mxu0 0.0
    %114 = vmatpush2.msra.mxu0 0.0
    %115 = vmatprep.subr.mxu0 0.0
    %116 = vmatpush2.msra.mxu0 0.0
    %117 = vmatprep.subr.mxu0 0.0
    %118 = vmatpush2.msra.mxu0 0.0
    %119 = vmatprep.mubr.f32.mxu0 0.0
    %120 = vmatmul.mubr.f32.gmra.mxu0 %v53
    %v121 = vpop.f32.mrf.mxu0
    %v122 = vadd.f32 %v49, %v121
    %v123 = vpop.f32.mrf.mxu0
    %124 = vdwg.mxu0
    %vm125 = vcmask 261120
    %126 = vst.msk [vmem:[#allocation3] sm:$0xff] %vm125, %v122
    %v127 = vld [vmem:[%s4] sm:$0xff]
    %v128 = vld [vmem:[%s4 + $0x8] sm:$0xff]
    %v129 = vld [vmem:[%s4 + $0x10] sm:$0xff]
    %v130 = vld [vmem:[%s4 + $0x18] sm:$0xff]
    %v131 = vld [vmem:[%s5] sm:$0x1]
    %v133 = vlaneseq
    %v134 = vshrl.u32 %v133, 7
    %v135 = vsub.s32 0, %v134
    %v136 = vrot.slane %v131, %v135
    %v139 = vsel %vm125, %v122, 0
    %141 = vmatprep.subr.mxu0 0.0
    %142 = vmatpush1.msra.mxu0 0.0
    %143 = vmatprep.subr.mxu0 0.0
    %144 = vmatpush1.msra.mxu0 0.0
    %145 = vmatprep.subr.mxu0 0.0
    %146 = vmatpush1.msra.mxu0 0.0
    %147 = vmatprep.subr.mxu0 0.0
    %148 = vmatpush1.msra.mxu0 0.0
    %149 = vmatprep.subr.mxu0 0.0
    %150 = vmatpush1.msra.mxu0 0.0
    %151 = vmatprep.subr.mxu0 0.0
    %152 = vmatpush1.msra.mxu0 0.0
    %153 = vmatprep.subr.mxu0 0.0
    %154 = vmatpush1.msra.mxu0 0.0
    %155 = vmatprep.subr.mxu0 0.0
    %156 = vmatpush1.msra.mxu0 0.0
    %157 = vmatprep.subr.mxu0 0.0
    %158 = vmatpush1.msra.mxu0 0.0
    %159 = vmatprep.subr.mxu0 0.0
    %160 = vmatpush1.msra.mxu0 0.0
    %161 = vmatprep.subr.mxu0 0.0
    %162 = vmatpush1.msra.mxu0 0.0
    %163 = vmatprep.subr.mxu0 0.0
    %164 = vmatpush1.msra.mxu0 0.0
    %165 = vmatprep.subr.mxu0 0.0
    %166 = vmatpush1.msra.mxu0 %v130
    %167 = vmatprep.subr.mxu0 0.0
    %168 = vmatpush1.msra.mxu0 %v129
    %169 = vmatprep.subr.mxu0 0.0
    %170 = vmatpush1.msra.mxu0 %v128
    %171 = vmatprep.subr.mxu0 0.0
    %172 = vmatpush1.msra.mxu0 %v127
    %173 = vmatprep.subr.mxu0 0.0
    %174 = vmatpush2.msra.mxu0 0.0
    %175 = vmatprep.subr.mxu0 0.0
    %176 = vmatpush2.msra.mxu0 0.0
    %177 = vmatprep.subr.mxu0 0.0
    %178 = vmatpush2.msra.mxu0 0.0
    %179 = vmatprep.subr.mxu0 0.0
    %180 = vmatpush2.msra.mxu0 0.0
    %181 = vmatprep.subr.mxu0 0.0
    %182 = vmatpush2.msra.mxu0 0.0
    %183 = vmatprep.subr.mxu0 0.0
    %184 = vmatpush2.msra.mxu0 0.0
    %185 = vmatprep.subr.mxu0 0.0
    %186 = vmatpush2.msra.mxu0 0.0
    %187 = vmatprep.subr.mxu0 0.0
    %188 = vmatpush2.msra.mxu0 0.0
    %189 = vmatprep.subr.mxu0 0.0
    %190 = vmatpush2.msra.mxu0 0.0
    %191 = vmatprep.subr.mxu0 0.0
    %192 = vmatpush2.msra.mxu0 0.0
    %193 = vmatprep.subr.mxu0 0.0
    %194 = vmatpush2.msra.mxu0 0.0
    %195 = vmatprep.subr.mxu0 0.0
    %196 = vmatpush2.msra.mxu0 0.0
    %197 = vmatprep.subr.mxu0 0.0
    %198 = vmatpush2.msra.mxu0 0.0
    %199 = vmatprep.subr.mxu0 0.0
    %200 = vmatpush2.msra.mxu0 0.0
    %201 = vmatprep.subr.mxu0 0.0
    %202 = vmatpush2.msra.mxu0 0.0
    %203 = vmatprep.subr.mxu0 0.0
    %204 = vmatpush2.msra.mxu0 0.0
    %205 = vmatprep.mubr.f32.mxu0 0.0
    %206 = vmatmul.mubr.f32.gmra.mxu0 %v139
    %v207 = vpop.f32.mrf.mxu0
    %v208 = vadd.f32 %v136, %v207
    %v209 = vpop.f32.mrf.mxu0
    %210 = vdwg.mxu0
    %211 = vst.msk [vmem:[#allocation5] sm:$0xff] %vm28, %v208
    // Predicated region
    $region26: #{tpu_custom_call.1} parent=1 // pred_check
      _
    $region27: #{tpu_custom_call.1} parent=1 // pred_check_branch
      %213 = sbr.rel (0) target = $region29
    $region28: #{tpu_custom_call.1} parent=1 // pred_region
      %s215 = ssub.s32 128, 128
      %216 = vsyncadd [#allocation4], %s215
      %s218 = sshll.u32 [#allocation3], 4
      %s219 = int_to_ptr.vmem [resolvable:$true] %s218
      %221 = dma.vmem_to_hbm [thread:$0]  %s219, 128, %s6, [#allocation4]
    $region29: #{tpu_custom_call.1} parent=1 // pred_fallthru
      _
    // Predicated region
    $region30: #{tpu_custom_call.1} parent=1 // pred_check
      _
    $region31: #{tpu_custom_call.1} parent=1 // pred_check_branch
      %223 = sbr.rel (0) target = $region33
    $region32: #{tpu_custom_call.1} parent=1 // pred_region
      %s225 = ssub.s32 128, 128
      %226 = vsyncadd [#allocation6], %s225
      %s228 = sshll.u32 [#allocation5], 4
      %s229 = int_to_ptr.vmem [resolvable:$true] %s228
      %231 = dma.vmem_to_hbm [thread:$0]  %s229, 128, %s7, [#allocation6]
    $region33: #{tpu_custom_call.1} parent=1 // pred_fallthru
      _
    // Predicated region
    $region34: #{tpu_custom_call.1} parent=1 // pred_check
      _
    $region35: #{tpu_custom_call.1} parent=1 // pred_check_branch
      %233 = sbr.rel (0) target = $region37
    $region36: #{tpu_custom_call.1} parent=1 // pred_region
      %234 = dma.done [#allocation4], 128
    $region37: #{tpu_custom_call.1} parent=1 // pred_fallthru
      _
    // Predicated region
    $region38: #{tpu_custom_call.1} parent=1 // pred_check
      _
    $region39: #{tpu_custom_call.1} parent=1 // pred_check_branch
      %236 = sbr.rel (0) target = $region41
    $region40: #{tpu_custom_call.1} parent=1 // pred_region
      %237 = dma.done [#allocation6], 128
    $region41: #{tpu_custom_call.1} parent=1 // pred_fallthru
      _
    %238 = vsyncpa [#allocation4], 1
    %239 = vsyncpa [#allocation6], 1

</llo_original>
